<compile_context>
chip_gen: v7x
topology: tpu7x:2x2x1
jax: 0.10.0
libtpu: 0.0.40
codegen_flags: <defaults>
</compile_context>

<pallas_src>
import functools

import jax
import jax.numpy as jnp
from jax.experimental import pallas as pl
from jax.experimental.pallas import tpu as pltpu

_LN_EPS = 1e-5


# ---------------------------------------------------------------------------
# Hardware-aware VMEM budget
# ---------------------------------------------------------------------------
@functools.lru_cache(maxsize=None)
def _vmem_limit_bytes():
    # v5e/v6e: 128 MiB VMEM per core; v7x: 64 MiB.  Budget ~75% of whatever we
    # are actually on, capped at 96 MiB.
    try:
        cap = int(pltpu.get_tpu_info().vmem_capacity_bytes)
    except Exception:
        cap = 64 * 1024 * 1024
    return min((cap * 3) // 4, 96 * 1024 * 1024)


# ---------------------------------------------------------------------------
# Shared numerics helper (used inside kernels and by the f32 reference)
# ---------------------------------------------------------------------------
def _layernorm(x, g, b, eps=_LN_EPS):
    mu = jnp.mean(x, axis=-1, keepdims=True)
    var = jnp.mean((x - mu) ** 2, axis=-1, keepdims=True)
    return (x - mu) * jax.lax.rsqrt(var + eps) * g + b


# ---------------------------------------------------------------------------
# Pallas kernels
# ---------------------------------------------------------------------------
def qkv_kernel(x_ref, wqkv_ref, bqkv_ref, qkv_ref):
    """Token-row tile of the QKV projection (bf16 MXU inputs, f32 accumulate)."""
    x = x_ref[...]                                                    # (tm, E) bf16
    qkv = jnp.dot(x, wqkv_ref[...],
                  preferred_element_type=jnp.float32) + bqkv_ref[0]   # (tm, 3E) f32
    qkv_ref[...] = qkv.astype(qkv_ref.dtype)                          # store bf16


def attn_ffn_kernel(x_ref, qkvq_ref, qkv_ref,
                    wo_ref, bo_ref, ln1g_ref, ln1b_ref,
                    w1_ref, b1_ref, w2_ref, b2_ref, ln2g_ref, ln2b_ref,
                    out_ref, ctx_ref, *, num_heads):
    """Fused attention + residual + LN1 + FFN + residual + LN2 for one
    (batch element, query-row tile).

    x block      : (1, tq, E)  bf16  -- residual input rows
    qkvq block   : (1, tq, 3E) bf16  -- Q rows for this tile (1/sqrt(Dh) folded in)
    qkv block    : (1, L, 3E)  bf16  -- full-sequence K/V, resident across q tiles
    ctx scratch  : (tq, E)     bf16  -- per-head contexts, so W_o runs as one K=E matmul
    """
    H = num_heads
    x = x_ref[0].astype(jnp.float32)                                  # (tq, E) f32
    tq, E = x.shape
    Dh = E // H

    qrows = qkvq_ref[0]                                               # (tq, 3E) bf16
    kv = qkv_ref[0]                                                   # (L, 3E)  bf16

    for h in range(H):
        q_h = qrows[:, h * Dh:(h + 1) * Dh]                           # (tq, Dh)
        k_h = kv[:, E + h * Dh:E + (h + 1) * Dh]                      # (L, Dh)
        v_h = kv[:, 2 * E + h * Dh:2 * E + (h + 1) * Dh]              # (L, Dh)
        s = jax.lax.dot_general(q_h, k_h, (((1,), (1,)), ((), ())),
                                preferred_element_type=jnp.float32)   # (tq, L) f32
        s = s - jnp.max(s, axis=-1, keepdims=True)
        p = jnp.exp(s)
        p = p * pl.reciprocal(jnp.sum(p, axis=-1, keepdims=True), approx=True)
        ctx_ref[:, h * Dh:(h + 1) * Dh] = jnp.dot(
            p.astype(jnp.bfloat16), v_h,
            preferred_element_type=jnp.float32).astype(ctx_ref.dtype)

    # Single K=E output projection (bf16 MXU, f32 accumulate).
    attn = jnp.dot(ctx_ref[...], wo_ref[...],
                   preferred_element_type=jnp.float32) + bo_ref[0]    # (tq, E) f32

    # Residual + LayerNorm1 (f32).
    h1 = _layernorm(x + attn, ln1g_ref[0], ln1b_ref[0])

    # FFN: Linear -> ReLU -> Linear, residual, LayerNorm2.  h1 never leaves VMEM.
    ff = jnp.dot(h1.astype(jnp.bfloat16), w1_ref[...],
                 preferred_element_type=jnp.float32) + b1_ref[0]
    ff = jnp.maximum(ff, 0.0)
    ff = jnp.dot(ff.astype(jnp.bfloat16), w2_ref[...],
                 preferred_element_type=jnp.float32) + b2_ref[0]
    out_ref[0] = _layernorm(h1 + ff, ln2g_ref[0], ln2b_ref[0]).astype(out_ref.dtype)


def logits_kernel(x_ref, w_ref, b_ref, out_ref):
    """(N, tl, E) x (E, tn) -> logits written directly as (tl, N, tn)."""
    n, tl, e = x_ref.shape
    x = x_ref[...].reshape(n * tl, e)                                 # bf16
    y = jnp.dot(x, w_ref[...], preferred_element_type=jnp.float32) + b_ref[0]
    # Cheap in-VMEM sublane transpose -> avoids a full HBM transpose of logits.
    out_ref[...] = jnp.transpose(y.reshape(n, tl, -1), (1, 0, 2)).astype(out_ref.dtype)


# ---------------------------------------------------------------------------
# Spec / tiling helpers
# ---------------------------------------------------------------------------
def _const_specs(weights, grid_rank):
    """Full-array blocks resident across the whole grid (index map = zeros)."""
    specs = []
    for w in weights:
        zeros = (0,) * w.ndim
        if grid_rank == 1:
            specs.append(pl.BlockSpec(w.shape, lambda i, _z=zeros: _z))
        elif grid_rank == 2:
            specs.append(pl.BlockSpec(w.shape, lambda i, j, _z=zeros: _z))
        else:
            raise ValueError(grid_rank)
    return specs


def _row_tile(m, target=512):
    """Token-row tile: full if small, else the largest multiple-of-8 divisor <= target."""
    if m <= target:
        return m
    t = (target // 8) * 8
    while t >= 8:
        if m % t == 0:
            return t
        t -= 8
    # TODO(synk): pad the token axis to a multiple of 8 for awkward M instead of one giant block.
    return m


def _lane_tile(v, target=1024):
    """Lane-dense tile (multiple of 128) along the vocab axis, or full width if small."""
    if v <= target:
        return v
    t = (target // 128) * 128
    while t >= 128:
        if v % t == 0:
            return t
        t -= 128
    # TODO(synk): pad the vocab axis to a multiple of 128 instead of one giant block.
    return v


# ---------------------------------------------------------------------------
# Python wrappers around pallas_call
# ---------------------------------------------------------------------------
def qkv_projection(x2d, lp):
    """x2d: (M, E) bf16 token-major -> qkv (M, 3E) bf16 (Q columns pre-scaled)."""
    M, E = x2d.shape
    tm = _row_tile(M)
    wqkv, bqkv = lp['wqkv'], lp['bqkv']
    flops = 2 * M * E * 3 * E
    bytes_accessed = int(2 * M * E + 2 * M * 3 * E
                         + int(wqkv.size) * 2 + int(bqkv.size) * 4)
    return pl.pallas_call(
        qkv_kernel,
        out_shape=jax.ShapeDtypeStruct((M, 3 * E), jnp.bfloat16),
        grid=(M // tm,),
        in_specs=[pl.BlockSpec((tm, E), lambda i: (i, 0))]
                 + _const_specs((wqkv, bqkv), grid_rank=1),
        out_specs=pl.BlockSpec((tm, 3 * E), lambda i: (i, 0)),
        compiler_params=pltpu.CompilerParams(
            dimension_semantics=("parallel",),
            vmem_limit_bytes=_vmem_limit_bytes()),
        cost_estimate=pl.CostEstimate(flops=int(flops), transcendentals=0,
                                      bytes_accessed=bytes_accessed),
    )(x2d, wqkv, bqkv)


def attn_ffn_block(x, qkv, lp, num_heads):
    """x: (N, L, E) bf16 layer input; qkv: (N, L, 3E) bf16.
    Returns the full transformer-layer output (N, L, E) bf16 (post-LN2)."""
    N, L, E = x.shape
    F = lp['w1'].shape[1]
    tq = _row_tile(L, target=256)
    kernel = functools.partial(attn_ffn_kernel, num_heads=num_heads)
    weights = (lp['wo'], lp['bo'], lp['ln1_g'], lp['ln1_b'],
               lp['w1'], lp['b1'], lp['w2'], lp['b2'], lp['ln2_g'], lp['ln2_b'])
    flops = N * (4 * L * L * E + 2 * L * E * E + 4 * L * E * F)
    bytes_accessed = int(2 * 2 * N * L * E + 2 * 2 * N * L * 3 * E
                         + sum(int(w.size) * w.dtype.itemsize for w in weights))
    return pl.pallas_call(
        kernel,
        out_shape=jax.ShapeDtypeStruct((N, L, E), jnp.bfloat16),
        grid=(N, L // tq),
        in_specs=[pl.BlockSpec((1, tq, E), lambda b, qi: (b, qi, 0)),       # residual rows
                  pl.BlockSpec((1, tq, 3 * E), lambda b, qi: (b, qi, 0)),   # Q rows
                  pl.BlockSpec((1, L, 3 * E), lambda b, qi: (b, 0, 0))]     # K/V, resident
                 + _const_specs(weights, grid_rank=2),
        out_specs=pl.BlockSpec((1, tq, E), lambda b, qi: (b, qi, 0)),
        scratch_shapes=[pltpu.VMEM((tq, E), jnp.bfloat16)],                 # per-head ctx
        compiler_params=pltpu.CompilerParams(
            dimension_semantics=("parallel", "parallel"),
            vmem_limit_bytes=_vmem_limit_bytes()),
        cost_estimate=pl.CostEstimate(
            flops=int(flops),
            transcendentals=int(N * num_heads * L * L),
            bytes_accessed=bytes_accessed),
    )(x, qkv, qkv, *weights)


def output_projection(x, w_out, b_out):
    """x: (N, L, E) bf16 -> logits (L, N, V) f32, written directly in (L, N, V)."""
    N, L, E = x.shape
    V = w_out.shape[1]
    tl = _row_tile(L, target=256)
    tn = _lane_tile(V, target=1024)
    flops = 2 * N * L * E * V
    bytes_accessed = int(2 * N * L * E * max(1, V // tn)
                         + int(w_out.size) * 2 + int(b_out.size) * 4
                         + 4 * L * N * V)
    return pl.pallas_call(
        logits_kernel,
        out_shape=jax.ShapeDtypeStruct((L, N, V), jnp.float32),
        # Vocab axis OUTER: each (E, tn) weight tile streams exactly once while
        # the (much smaller) activation row tiles iterate on the inside.
        grid=(V // tn, L // tl),
        in_specs=[pl.BlockSpec((N, tl, E), lambda j, i: (0, i, 0)),
                  pl.BlockSpec((E, tn), lambda j, i: (0, j)),
                  pl.BlockSpec((1, tn), lambda j, i: (0, j))],
        out_specs=pl.BlockSpec((tl, N, tn), lambda j, i: (i, 0, j)),
        compiler_params=pltpu.CompilerParams(
            dimension_semantics=("parallel", "parallel"),
            vmem_limit_bytes=_vmem_limit_bytes()),
        cost_estimate=pl.CostEstimate(flops=int(flops), transcendentals=0,
                                      bytes_accessed=bytes_accessed),
    )(x, w_out, b_out)


def gpt_forward(token_ids, prepped, num_heads):
    """token_ids: (L, N) int32 -> logits (L, N, V)  (same layout as the PyTorch module)."""
    L, N = token_ids.shape
    emb = prepped['embedding']
    E = emb.shape[1]
    # Embedding gather (plain-JAX glue) directly into batch-major token layout;
    # inter-kernel activations are bf16 (math inside the kernels is f32).
    x = jnp.take(emb, jnp.reshape(token_ids.T, (-1,)), axis=0).astype(jnp.bfloat16)
    x = x.reshape(N, L, E)
    for lp in prepped['layers']:
        qkv = qkv_projection(x.reshape(N * L, E), lp).reshape(N, L, 3 * E)
        x = attn_ffn_block(x, qkv, lp, num_heads)
    return output_projection(x, prepped['w_out'], prepped['b_out'])   # (L, N, V)


# ---------------------------------------------------------------------------
# Deterministic parameter init (shapes from GPT.__init__) + kernel prep
# ---------------------------------------------------------------------------
def init_params(key, vocab_size, embedding_size, num_heads, ff_dim, num_layers):
    std = 0.02
    keys = jax.random.split(key, 2 + num_layers)
    params = {
        'embedding': std * jax.random.normal(keys[0], (vocab_size, embedding_size), jnp.float32),
        'w_out': std * jax.random.normal(keys[1], (embedding_size, vocab_size), jnp.float32),
        'b_out': jnp.zeros((1, vocab_size), jnp.float32),
        'layers': [],
    }
    for i in range(num_layers):
        lk = jax.random.split(keys[2 + i], 4)
        params['layers'].append(dict(
            wqkv=std * jax.random.normal(lk[0], (embedding_size, 3 * embedding_size), jnp.float32),
            bqkv=jnp.zeros((1, 3 * embedding_size), jnp.float32),
            wo=std * jax.random.normal(lk[1], (embedding_size, embedding_size), jnp.float32),
            bo=jnp.zeros((1, embedding_size), jnp.float32),
            ln1_g=jnp.ones((1, embedding_size), jnp.float32),
            ln1_b=jnp.zeros((1, embedding_size), jnp.float32),
            w1=std * jax.random.normal(lk[2], (embedding_size, ff_dim), jnp.float32),
            b1=jnp.zeros((1, ff_dim), jnp.float32),
            w2=std * jax.random.normal(lk[3], (ff_dim, embedding_size), jnp.float32),
            b2=jnp.zeros((1, embedding_size), jnp.float32),
            ln2_g=jnp.ones((1, embedding_size), jnp.float32),
            ln2_b=jnp.zeros((1, embedding_size), jnp.float32),
        ))
    return params


def prepare_params(params, num_heads):
    """One-time weight rewrite: fold 1/sqrt(Dh) into Q, pre-cast all MXU weights to bf16."""
    E = params['embedding'].shape[1]
    Dh = E // num_heads
    scale = 1.0 / float(Dh) ** 0.5
    prepped = {
        'embedding': params['embedding'],                 # f32 table (XLA gather)
        'w_out': params['w_out'].astype(jnp.bfloat16),
        'b_out': params['b_out'],
        'layers': [],
    }
    for lp in params['layers']:
        prepped['layers'].append(dict(
            wqkv=lp['wqkv'].at[:, :E].multiply(scale).astype(jnp.bfloat16),
            bqkv=lp['bqkv'].at[:, :E].multiply(scale),
            wo=lp['wo'].astype(jnp.bfloat16),
            bo=lp['bo'],
            ln1_g=lp['ln1_g'], ln1_b=lp['ln1_b'],
            w1=lp['w1'].astype(jnp.bfloat16), b1=lp['b1'],
            w2=lp['w2'].astype(jnp.bfloat16), b2=lp['b2'],
            ln2_g=lp['ln2_g'], ln2_b=lp['ln2_b'],
        ))
    return prepped


# ---------------------------------------------------------------------------
# Pure-JAX f32 reference (correctness check)
# ---------------------------------------------------------------------------
def reference_forward(token_ids, params, num_heads):
    x = params['embedding'][token_ids]                    # (L, N, E)
    L, N, E = x.shape
    H = num_heads
    Dh = E // H
    for lp in params['layers']:
        qkv = jnp.einsum('lne,ef->lnf', x, lp['wqkv']) + lp['bqkv'][0]
        q = qkv[..., :E].reshape(L, N, H, Dh) * (1.0 / float(Dh) ** 0.5)
        k = qkv[..., E:2 * E].reshape(L, N, H, Dh)
        v = qkv[..., 2 * E:].reshape(L, N, H, Dh)
        s = jnp.einsum('lnhd,mnhd->nhlm', q, k)
        p = jax.nn.softmax(s, axis=-1)
        a = jnp.einsum('nhlm,mnhd->lnhd', p, v).reshape(L, N, E)
        a = a @ lp['wo'] + lp['bo'][0]
        h1 = _layernorm(x + a, lp['ln1_g'][0], lp['ln1_b'][0])
        ff = jnp.maximum(h1 @ lp['w1'] + lp['b1'][0], 0.0) @ lp['w2'] + lp['b2'][0]
        x = _layernorm(h1 + ff, lp['ln2_g'][0], lp['ln2_b'][0])
    return x @ params['w_out'] + params['b_out'][0]


# ---------------------------------------------------------------------------
if __name__ == "__main__":
    # Small config consistent with GPT.__init__
    vocab_size, embedding_size, num_heads, ff_dim, num_layers = 128, 32, 4, 64, 2
    seq_len, batch = 8, 2

    key = jax.random.PRNGKey(0)
    pkey, dkey = jax.random.split(key)
    params = init_params(pkey, vocab_size, embedding_size, num_heads, ff_dim, num_layers)
    prepped = prepare_params(params, num_heads)

    # nn.MultiheadAttention (batch_first=False) => token ids are (L, N)
    token_ids = jax.random.randint(dkey, (seq_len, batch), 0, vocab_size, dtype=jnp.int32)

    # TODO(synk): dropout is identity (eval-mode); training-mode dropout would need pltpu PRNG.
    logits = gpt_forward(token_ids, prepped, num_heads)
    logits = jax.block_until_ready(logits)

    ref = reference_forward(token_ids, params, num_heads)
    assert logits.shape == (seq_len, batch, vocab_size), logits.shape
    # bf16 weights + bf16 layer-boundary activations + approx-reciprocal softmax
    # vs the exact-f32 reference (expected max |err| ~3e-3 at this scale).
    err = float(jnp.max(jnp.abs(logits - ref)))
    assert jnp.allclose(logits, ref, atol=1e-2, rtol=1e-2), f"mismatch vs JAX reference: {err}"

    print("KERNEL_OK")
</pallas_src>

<mosaic_0001>
module attributes {stable_mosaic.version = 11 : i64} {
  func.func @qkv_kernel(%arg0: i32, %arg1: memref<16x32xbf16, #tpu.memory_space<vmem>>, %arg2: memref<32x96xbf16, #tpu.memory_space<vmem>>, %arg3: memref<1x96xf32, #tpu.memory_space<vmem>>, %arg4: memref<16x96xbf16, #tpu.memory_space<vmem>>) attributes {dimension_semantics = [#tpu.dimension_semantics<parallel>], iteration_bounds = array<i64: 1>, scalar_prefetch = 0 : i64, scratch_operands = 0 : i64, tpu.core_type = #tpu.core_type<tc>, window_params = [{transform_indices = @transform_0, window_bounds = array<i64: 16, 32>}, {pipeline_mode = #tpu.pipeline_mode<synchronous>, transform_indices = @transform_1, window_bounds = array<i64: 32, 96>}, {pipeline_mode = #tpu.pipeline_mode<synchronous>, transform_indices = @transform_2, window_bounds = array<i64: 1, 96>}, {transform_indices = @transform_3, window_bounds = array<i64: 16, 96>}]} {
    %c0 = arith.constant 0 : index
    %c0_0 = arith.constant 0 : index
    %0 = vector.load %arg1[%c0, %c0_0] : memref<16x32xbf16, #tpu.memory_space<vmem>>, vector<16x32xbf16>
    %c0_1 = arith.constant 0 : index
    %c0_2 = arith.constant 0 : index
    %1 = vector.load %arg2[%c0_1, %c0_2] : memref<32x96xbf16, #tpu.memory_space<vmem>>, vector<32x96xbf16>
    %cst = arith.constant dense<0.000000e+00> : vector<16x96xf32>
    %2 = tpu.matmul %0, %1, %cst {dimension_numbers = #tpu.dot_dimension_numbers<[1], [0], [0], [1], [0, 0, 1, 1], [], []>} : vector<16x32xbf16>, vector<32x96xbf16>, vector<16x96xf32> -> vector<16x96xf32>
    %c0_3 = arith.constant 0 : index
    %c0_4 = arith.constant 0 : index
    %3 = vector.load %arg3[%c0_3, %c0_4] : memref<1x96xf32, #tpu.memory_space<vmem>>, vector<1x96xf32>
    %4 = vector.shape_cast %3 : vector<1x96xf32> to vector<96xf32>
    %5 = vector.shape_cast %4 : vector<96xf32> to vector<1x96xf32>
    %6 = vector.broadcast %5 : vector<1x96xf32> to vector<16x96xf32>
    %7 = arith.addf %2, %6 : vector<16x96xf32>
    %8 = arith.truncf %7 : vector<16x96xf32> to vector<16x96xbf16>
    %c0_5 = arith.constant 0 : index
    %c0_6 = arith.constant 0 : index
    %9 = vector.load %arg4[%c0_5, %c0_6] : memref<16x96xbf16, #tpu.memory_space<vmem>>, vector<16x96xbf16>
    tpu.vector_store %arg4[%c0_5, %c0_6], %8 {strides = array<i32>} : memref<16x96xbf16, #tpu.memory_space<vmem>>, vector<16x96xbf16>,
    return
  }
  func.func @transform_0(%arg0: i32) -> (i32, i32) {
    %c0_i32 = arith.constant 0 : i32
    %c0_i32_0 = arith.constant 0 : i32
    return %arg0, %c0_i32 : i32, i32
  }
  func.func @transform_1(%arg0: i32) -> (i32, i32) {
    %c0_i32 = arith.constant 0 : i32
    %c0_i32_0 = arith.constant 0 : i32
    %c0_i32_1 = arith.constant 0 : i32
    return %c0_i32, %c0_i32_0 : i32, i32
  }
  func.func @transform_2(%arg0: i32) -> (i32, i32) {
    %c0_i32 = arith.constant 0 : i32
    %c0_i32_0 = arith.constant 0 : i32
    %c0_i32_1 = arith.constant 0 : i32
    return %c0_i32, %c0_i32_0 : i32, i32
  }
  func.func @transform_3(%arg0: i32) -> (i32, i32) {
    %c0_i32 = arith.constant 0 : i32
    %c0_i32_0 = arith.constant 0 : i32
    return %arg0, %c0_i32 : i32, i32
  }
}

</mosaic_0001>

<llo_original>
// kernel: tpu_custom_call.1
$region0: #{tpu_custom_call.1}
  #allocation0 [shape = 'u32[]', space=smem, size = 0x4, offset = 0x4, fixed_abs, tag = 'smem constant byte address 0x4 - core index']
  #allocation1 [shape = 'u32[144,128]{1,0:T(1,128)}', space=vmem, size = 0x12000, scoped, tag = 'internal scratch']
  %s0 = inlined_call_operand.hbm [shape: bf16[16,32], index: 0, kind: input, shape index: {}]
  %s1 = inlined_call_operand.hbm [shape: bf16[32,96], index: 1, kind: input, shape index: {}]
  %s2 = inlined_call_operand.vmem [shape: f32[1,96], index: 2, kind: input, shape index: {}]
  %s3 = inlined_call_operand.hbm [shape: bf16[16,96], index: 3, kind: output, shape index: {}]
  %s4 = sld [smem:[#allocation0]]
  $region30: #{tpu_custom_call.1} parent=0
    _
  %s6 = ssub.s32 1, %s4
  %s7 = scalar_select 0, %s6, %s4
  $region1: #{tpu_custom_call.1} parent=0
    #allocation2 [shape = 'u8[4096]{0}', space=vmem, size = 0x1000, scoped, tag = 'input window, operand 0, single buffered']
    #allocation3 [shape = 's32[1]{0}', space=sflag, size = 0x4, scoped, tag = 'scoped memory for tpu_custom_call.1']
    #allocation4 [shape = 's32[1]{0}', space=sflag, size = 0x4, scoped, tag = 'scoped memory for tpu_custom_call.1']
    #allocation5 [shape = 'u8[8192]{0}', space=vmem, size = 0x2000, scoped, tag = 'input window, operand 1, single buffered']
    #allocation6 [shape = 's32[1]{0}', space=sflag, size = 0x4, scoped, tag = 'scoped memory for tpu_custom_call.1']
    #allocation7 [shape = 'u8[4096]{0}', space=vmem, size = 0x1000, scoped, tag = 'output window, operand 0, single buffered']
    %8 = vsyncpa [#allocation3], 0
    %9 = vsyncpa [#allocation6], 0
    %10 = vsyncpa [#allocation4], 0
    // Predicated region
    $region2: #{tpu_custom_call.1} parent=1 // pred_check
      _
    $region3: #{tpu_custom_call.1} parent=1 // pred_check_branch
      %12 = sbr.rel (0) target = $region5
    $region4: #{tpu_custom_call.1} parent=1 // pred_region
      %s14 = ssub.s32 128, 128
      %15 = vsyncadd [#allocation3], %s14
      %s16 = sshll.u32 [#allocation2], 4
      %s17 = int_to_ptr.vmem [resolvable:$true] %s16
      %22 = dma.hbm_to_vmem [thread:$0]  %s0, 128, %s17, [#allocation3], 64, 64, 4
    $region5: #{tpu_custom_call.1} parent=1 // pred_fallthru
      _
    // Predicated region
    $region6: #{tpu_custom_call.1} parent=1 // pred_check
      _
    $region7: #{tpu_custom_call.1} parent=1 // pred_check_branch
      %24 = sbr.rel (0) target = $region9
    $region8: #{tpu_custom_call.1} parent=1 // pred_region
      %s26 = ssub.s32 256, 256
      %27 = vsyncadd [#allocation6], %s26
      %s28 = sshll.u32 [#allocation5], 4
      %s29 = int_to_ptr.vmem [resolvable:$true] %s28
      %34 = dma.hbm_to_vmem [thread:$0]  %s1, 256, %s29, [#allocation6], 64, 64, 4
    $region9: #{tpu_custom_call.1} parent=1 // pred_fallthru
      _
    // Predicated region
    $region10: #{tpu_custom_call.1} parent=1 // pred_check
      _
    $region11: #{tpu_custom_call.1} parent=1 // pred_check_branch
      %36 = sbr.rel (0) target = $region13
    $region12: #{tpu_custom_call.1} parent=1 // pred_region
      _
    $region13: #{tpu_custom_call.1} parent=1 // pred_fallthru
      _
    // Predicated region
    $region14: #{tpu_custom_call.1} parent=1 // pred_check
      _
    $region15: #{tpu_custom_call.1} parent=1 // pred_check_branch
      %38 = sbr.rel (0) target = $region17
    $region16: #{tpu_custom_call.1} parent=1 // pred_region
      %39 = dma.done [#allocation3], 128
    $region17: #{tpu_custom_call.1} parent=1 // pred_fallthru
      _
    // Predicated region
    $region18: #{tpu_custom_call.1} parent=1 // pred_check
      _
    $region19: #{tpu_custom_call.1} parent=1 // pred_check_branch
      %41 = sbr.rel (0) target = $region21
    $region20: #{tpu_custom_call.1} parent=1 // pred_region
      %42 = dma.done [#allocation6], 256
    $region21: #{tpu_custom_call.1} parent=1 // pred_fallthru
      _
    %v44 = vld [vmem:[#allocation2] sm:$0xf]
    %v45 = vld [vmem:[#allocation2 + $0x4] sm:$0xf]
    %v46 = vld [vmem:[#allocation5] sm:$0xf]
    %v47 = vld [vmem:[#allocation5 + $0x4] sm:$0xf]
    %v48 = vld [vmem:[#allocation5 + $0x8] sm:$0xf]
    %v49 = vld [vmem:[#allocation5 + $0xc] sm:$0xf]
    %v50 = vld [vmem:[%s2] sm:$0x1]
    %v52 = vlaneseq
    %v53 = vshrl.u32 %v52, 7
    %v54 = vsub.s32 0, %v53
    %v55 = vrot.slane %v50, %v54
    %v59 = vunpack.c.l.b16 %v44
    %v60 = vunpack.c.l.b16 %v45
    %v61 = vpack.c.b16 %v60, %v59
    %v66 = vunpack.c.l.b16 %v46
    %v67 = vunpack.c.l.b16 %v47
    %v68 = vunpack.c.l.b16 %v48
    %v69 = vunpack.c.l.b16 %v49
    %v70 = vpack.c.b16 %v67, %v66
    %v71 = vpack.c.b16 %v69, %v68
    %vm74 = vcmask 261120
    %v76 = vsel %vm74, %v61, 0
    %78 = vmatprep.subr.bf16.mxu0 0
    %79 = vmatpush1.bf16.msra.mxu0 %v70
    %80 = vmatprep.subr.bf16.mxu0 0
    %81 = vmatpush1.bf16.msra.mxu0 %v71
    %82 = vmatprep.subr.bf16.mxu0 0
    %83 = vmatpush1.bf16.msra.mxu0 0
    %84 = vmatprep.subr.bf16.mxu0 0
    %85 = vmatpush1.bf16.msra.mxu0 0
    %86 = vmatprep.subr.bf16.mxu0 0
    %87 = vmatpush1.bf16.msra.mxu0 0
    %88 = vmatprep.subr.bf16.mxu0 0
    %89 = vmatpush1.bf16.msra.mxu0 0
    %90 = vmatprep.subr.bf16.mxu0 0
    %91 = vmatpush1.bf16.msra.mxu0 0
    %92 = vmatprep.subr.bf16.mxu0 0
    %93 = vmatpush1.bf16.msra.mxu0 0
    %94 = vmatprep.subr.bf16.mxu0 0
    %95 = vmatpush1.bf16.msra.mxu0 0
    %96 = vmatprep.subr.bf16.mxu0 0
    %97 = vmatpush1.bf16.msra.mxu0 0
    %98 = vmatprep.subr.bf16.mxu0 0
    %99 = vmatpush1.bf16.msra.mxu0 0
    %100 = vmatprep.subr.bf16.mxu0 0
    %101 = vmatpush1.bf16.msra.mxu0 0
    %102 = vmatprep.subr.bf16.mxu0 0
    %103 = vmatpush1.bf16.msra.mxu0 0
    %104 = vmatprep.subr.bf16.mxu0 0
    %105 = vmatpush1.bf16.msra.mxu0 0
    %106 = vmatprep.subr.bf16.mxu0 0
    %107 = vmatpush1.bf16.msra.mxu0 0
    %108 = vmatprep.subr.bf16.mxu0 0
    %109 = vmatpush1.bf16.msra.mxu0 0
    %110 = vmatprep.mubr.bf16.mxu0 0
    %111 = vmatmul.mubr.bf16.gmra.mrb[0].mxu0 %v76
    %v112 = vpop.f32.mrb[0].mxu0
    %v113 = vadd.f32 %v55, %v112
    %v114 = vpop.f32.mrb[0].mxu0
    %v115 = vpop.f32.mrb[0].mxu0
    %v116 = vadd.f32 %v55, %v115
    %v117 = vpop.f32.mrb[0].mxu0
    %118 = vdwg.mxu0
    %v119 = vpack.c.bf16 %v116, %v113
    %v121 = vunpack.c.l.b16 %v119
    %v122 = vunpack.c.h.b16 %v119
    %v123 = vpack.c.b16 %v121, %v121
    %v124 = vpack.c.b16 %v122, %v122
    %vm127 = vcmask 781312
    %128 = vst.msk [vmem:[#allocation7] sm:$0xf] %vm127, %v123
    %129 = vst.msk [vmem:[#allocation7 + $0x4] sm:$0xf] %vm127, %v124
    // Predicated region
    $region22: #{tpu_custom_call.1} parent=1 // pred_check
      _
    $region23: #{tpu_custom_call.1} parent=1 // pred_check_branch
      %131 = sbr.rel (0) target = $region25
    $region24: #{tpu_custom_call.1} parent=1 // pred_region
      %s133 = ssub.s32 128, 128
      %134 = vsyncadd [#allocation4], %s133
      %s135 = sshll.u32 [#allocation7], 4
      %s136 = int_to_ptr.vmem [resolvable:$true] %s135
      %141 = dma.vmem_to_hbm [thread:$0]  %s136, 128, %s3, [#allocation4], 64, 64, 4
    $region25: #{tpu_custom_call.1} parent=1 // pred_fallthru
      _
    // Predicated region
    $region26: #{tpu_custom_call.1} parent=1 // pred_check
      _
    $region27: #{tpu_custom_call.1} parent=1 // pred_check_branch
      %143 = sbr.rel (0) target = $region29
    $region28: #{tpu_custom_call.1} parent=1 // pred_region
      %144 = dma.done [#allocation4], 128
    $region29: #{tpu_custom_call.1} parent=1 // pred_fallthru
      _
    %145 = vsyncpa [#allocation3], 1
    %146 = vsyncpa [#allocation6], 1
    %147 = vsyncpa [#allocation4], 1

</llo_original>
